<compile_context>
chip_gen: v7x
topology: tpu7x:2x2x1
jax: 0.10.0
libtpu: 0.0.40
codegen_flags: <defaults>
</compile_context>

<pallas_src>
import jax
import jax.numpy as jnp
from jax.experimental import pallas as pl
from jax.experimental.pallas import tpu as pltpu


def _pointwise_kernel(x_ref, o_ref):
    # ((x + 5) * 2) ** 2 — pure VPU work, HBM-bound.  Python-int constants
    # keep arithmetic in the input dtype (ints stay ints, floats stay floats),
    # matching the PyTorch module's semantics for non-float inputs too.
    t = x_ref[...] + 5
    r = t * 2
    o_ref[...] = r * r


def _tpu_generation_params():
    """(block_bytes, vmem_limit_bytes, has_two_tensorcores) per TPU gen."""
    kind = ""
    try:
        kind = jax.devices()[0].device_kind.lower()
    except Exception:
        pass
    if "v5" in kind:      # v5e/v5p: 128 MiB physical VMEM, ~0.8 TB/s HBM
        return 6 << 20, 64 << 20, False
    if "v6" in kind:      # v6e: 128 MiB physical VMEM, ~1.4 TB/s HBM
        return 8 << 20, 48 << 20, False
    if "7" in kind:       # v7x: 64 MiB per-TC VMEM, 2 TCs, ~3.2 TB/s HBM
        return 10 << 20, 56 << 20, True
    return 4 << 20, 32 << 20, False     # unknown: conservative defaults


def pt_module_forward(x, donate_input: bool = False):
    """Computes ((x + 5) * 2) ** 2 elementwise via a Pallas TPU kernel."""
    orig_shape = x.shape
    dtype = x.dtype
    n = x.size
    itemsize = jnp.dtype(dtype).itemsize

    # Misaligned / tiny sizes: a pad + slice would ~3x the HBM traffic, so
    # just let XLA fuse the pointwise chain (still a single read+write pass).
    if n == 0 or n % 128 != 0:
        t = x + 5
        r = t * 2
        return r * r

    # Lane-dense slab: (rows, W), W a wide multiple of 128 that divides n
    # exactly — no padding copy ever hits the hot path.
    W = 128
    for cand in (4096, 2048, 1024, 512, 256, 128):
        if n % cand == 0:
            W = cand
            break
    rows = n // W
    x2d = jnp.ravel(x).reshape(rows, W)

    block_bytes, vmem_limit, two_tc = _tpu_generation_params()

    # Sublane packing per dtype: 8 rows (f32), 16 (bf16/f16), 32 (int8/fp8)
    # — keeps full packed vregs, no masked partial loads/stores per block.
    pack = max(8, 32 // itemsize)

    tile_rows = max(pack, block_bytes // (W * itemsize))
    tile_rows = (tile_rows // pack) * pack
    if tile_rows >= rows:
        tile_rows = rows                        # full extent: always legal
        # On v7x keep >= 2 grid steps so both TensorCores are fed; otherwise
        # one TC idles for inputs that fit a single block.
        if two_tc and rows >= 2 * pack:
            tile_rows = max(pack, (rows // 2 // pack) * pack)

    grid = (pl.cdiv(rows, tile_rows),)          # ragged last block is fine

    cost = pl.CostEstimate(
        flops=3 * n,                            # add + mul + mul per element
        transcendentals=0,
        bytes_accessed=2 * n * itemsize,        # one read + one write
    )

    out2d = pl.pallas_call(
        _pointwise_kernel,
        out_shape=jax.ShapeDtypeStruct((rows, W), dtype),
        grid=grid,
        in_specs=[pl.BlockSpec((tile_rows, W), lambda i: (i, 0))],
        out_specs=pl.BlockSpec((tile_rows, W), lambda i: (i, 0)),
        compiler_params=pltpu.CompilerParams(
            dimension_semantics=("parallel",),  # shard grid across TCs (v7x)
            vmem_limit_bytes=vmem_limit,        # room for 2x(in+out) blocks
        ),
        cost_estimate=cost,
        # Optional: reuse the input buffer when the caller donates x.
        input_output_aliases=({0: 0} if donate_input else {}),
    )(x2d)

    return out2d.reshape(orig_shape)


if __name__ == "__main__":
    key = jax.random.PRNGKey(0)
    x = jax.random.normal(key, (2, 4, 16, 16), dtype=jnp.float32)

    out = pt_module_forward(x)
    jax.block_until_ready(out)

    # correctness check against plain JAX reference
    ref = ((x + 5.0) * 2.0) ** 2
    assert out.shape == x.shape
    assert out.dtype == x.dtype
    assert jnp.allclose(out, ref, atol=1e-5, rtol=1e-5)

    print("KERNEL_OK")
</pallas_src>

<mosaic_0001>
module attributes {stable_mosaic.version = 11 : i64} {
  func.func @_pointwise_kernel(%arg0: i32, %arg1: memref<1x2048xf32, #tpu.memory_space<vmem>>, %arg2: memref<1x2048xf32, #tpu.memory_space<vmem>>) attributes {dimension_semantics = [#tpu.dimension_semantics<parallel>], iteration_bounds = array<i64: 1>, scalar_prefetch = 0 : i64, scratch_operands = 0 : i64, tpu.core_type = #tpu.core_type<tc>, window_params = [{transform_indices = @transform_0, window_bounds = array<i64: 1, 2048>}, {transform_indices = @transform_1, window_bounds = array<i64: 1, 2048>}]} {
    %c0 = arith.constant 0 : index
    %c0_0 = arith.constant 0 : index
    %0 = vector.load %arg1[%c0, %c0_0] : memref<1x2048xf32, #tpu.memory_space<vmem>>, vector<1x2048xf32>
    %cst = arith.constant 5.000000e+00 : f32
    %1 = vector.broadcast %cst : f32 to vector<1x2048xf32>
    %2 = arith.addf %0, %1 : vector<1x2048xf32>
    %cst_1 = arith.constant 2.000000e+00 : f32
    %3 = vector.broadcast %cst_1 : f32 to vector<1x2048xf32>
    %4 = arith.mulf %2, %3 : vector<1x2048xf32>
    %5 = arith.mulf %4, %4 : vector<1x2048xf32>
    %c0_2 = arith.constant 0 : index
    %c0_3 = arith.constant 0 : index
    %6 = vector.load %arg2[%c0_2, %c0_3] : memref<1x2048xf32, #tpu.memory_space<vmem>>, vector<1x2048xf32>
    tpu.vector_store %arg2[%c0_2, %c0_3], %5 {strides = array<i32>} : memref<1x2048xf32, #tpu.memory_space<vmem>>, vector<1x2048xf32>,
    return
  }
  func.func @transform_0(%arg0: i32) -> (i32, i32) {
    %c0_i32 = arith.constant 0 : i32
    %c0_i32_0 = arith.constant 0 : i32
    return %arg0, %c0_i32 : i32, i32
  }
  func.func @transform_1(%arg0: i32) -> (i32, i32) {
    %c0_i32 = arith.constant 0 : i32
    %c0_i32_0 = arith.constant 0 : i32
    return %arg0, %c0_i32 : i32, i32
  }
}

</mosaic_0001>

<llo_original>
// kernel: tpu_custom_call.1
$region0: #{tpu_custom_call.1}
  #allocation0 [shape = 'u32[]', space=smem, size = 0x4, offset = 0x4, fixed_abs, tag = 'smem constant byte address 0x4 - core index']
  #allocation1 [shape = 'u32[144,128]{1,0:T(1,128)}', space=vmem, size = 0x12000, scoped, tag = 'internal scratch']
  %s0 = inlined_call_operand.hbm [shape: f32[1,2048], index: 0, kind: input, shape index: {}]
  %s1 = inlined_call_operand.hbm [shape: f32[1,2048], index: 1, kind: output, shape index: {}]
  %s2 = sld [smem:[#allocation0]]
  $region18: #{tpu_custom_call.1} parent=0
    _
  %s4 = ssub.s32 1, %s2
  %s5 = scalar_select 0, %s4, %s2
  $region1: #{tpu_custom_call.1} parent=0
    #allocation2 [shape = 'u8[8192]{0}', space=vmem, size = 0x2000, scoped, tag = 'input window, operand 0, single buffered']
    #allocation3 [shape = 's32[1]{0}', space=sflag, size = 0x4, scoped, tag = 'scoped memory for tpu_custom_call.1']
    #allocation4 [shape = 's32[1]{0}', space=sflag, size = 0x4, scoped, tag = 'scoped memory for tpu_custom_call.1']
    #allocation5 [shape = 'u8[8192]{0}', space=vmem, size = 0x2000, scoped, tag = 'output window, operand 0, single buffered']
    %6 = vsyncpa [#allocation3], 0
    %7 = vsyncpa [#allocation4], 0
    // Predicated region
    $region2: #{tpu_custom_call.1} parent=1 // pred_check
      _
    $region3: #{tpu_custom_call.1} parent=1 // pred_check_branch
      %9 = sbr.rel (0) target = $region5
    $region4: #{tpu_custom_call.1} parent=1 // pred_region
      %s11 = ssub.s32 256, 256
      %12 = vsyncadd [#allocation3], %s11
      %s14 = sshll.u32 [#allocation2], 4
      %s15 = int_to_ptr.vmem [resolvable:$true] %s14
      %17 = dma.hbm_to_vmem [thread:$0]  %s0, 256, %s15, [#allocation3]
    $region5: #{tpu_custom_call.1} parent=1 // pred_fallthru
      _
    // Predicated region
    $region6: #{tpu_custom_call.1} parent=1 // pred_check
      _
    $region7: #{tpu_custom_call.1} parent=1 // pred_check_branch
      %19 = sbr.rel (0) target = $region9
    $region8: #{tpu_custom_call.1} parent=1 // pred_region
      %20 = dma.done [#allocation3], 256
    $region9: #{tpu_custom_call.1} parent=1 // pred_fallthru
      _
    %v21 = vld [vmem:[#allocation2] sm:$0xff]
    %v22 = vld [vmem:[#allocation2 + $0x8] sm:$0xff]
    %v23 = vadd.f32 %v21, 5.0
    %v24 = vadd.f32 %v22, 5.0
    %v25 = vmul.f32 %v23, 2.0
    %v26 = vmul.f32 %v24, 2.0
    %v27 = vmul.f32 %v25, %v25
    %v28 = vmul.f32 %v26, %v26
    %29 = vst [vmem:[#allocation5] sm:$0xff] %v27
    %30 = vst [vmem:[#allocation5 + $0x8] sm:$0xff] %v28
    // Predicated region
    $region10: #{tpu_custom_call.1} parent=1 // pred_check
      _
    $region11: #{tpu_custom_call.1} parent=1 // pred_check_branch
      %32 = sbr.rel (0) target = $region13
    $region12: #{tpu_custom_call.1} parent=1 // pred_region
      %s34 = ssub.s32 256, 256
      %35 = vsyncadd [#allocation4], %s34
      %s37 = sshll.u32 [#allocation5], 4
      %s38 = int_to_ptr.vmem [resolvable:$true] %s37
      %40 = dma.vmem_to_hbm [thread:$0]  %s38, 256, %s1, [#allocation4]
    $region13: #{tpu_custom_call.1} parent=1 // pred_fallthru
      _
    // Predicated region
    $region14: #{tpu_custom_call.1} parent=1 // pred_check
      _
    $region15: #{tpu_custom_call.1} parent=1 // pred_check_branch
      %42 = sbr.rel (0) target = $region17
    $region16: #{tpu_custom_call.1} parent=1 // pred_region
      %43 = dma.done [#allocation4], 256
    $region17: #{tpu_custom_call.1} parent=1 // pred_fallthru
      _
    %44 = vsyncpa [#allocation3], 1
    %45 = vsyncpa [#allocation4], 1

</llo_original>
